<compile_context>
chip_gen: v6e
topology: v6e:2x2x1
jax: 0.10.0
libtpu: 0.0.40
codegen_flags: <defaults>
</compile_context>

<pallas_src>
import functools

import jax
import jax.numpy as jnp
from jax import lax
from jax.experimental import pallas as pl
from jax.experimental.pallas import tpu as pltpu

EPS = 1e-5  # nn.LayerNorm default


def primary_caps_kernel(x_ref, w_ref, g_ref, p_ref, o_ref, *, oc):
    # x_ref : (TM, CKK)    bf16 patch rows for this tile
    # w_ref : (CKK, 2*OC)  bf16 [conv weights | per-capsule mean weights]
    # g_ref : (OC, OC)     bf16 block-diagonal (1/caps_dim) group-average matrix
    # p_ref : (4, OC)      f32  rows: conv bias, mean bias, gamma, beta
    # o_ref : (TM, OC)     bf16 lane-dense output tile
    acc = jnp.dot(x_ref[...], w_ref[...],
                  preferred_element_type=jnp.float32)       # one bf16 MXU pass
    u = acc[:, :oc] + p_ref[0:1, :]                          # conv output
    mean = acc[:, oc:] + p_ref[1:2, :]                        # per-capsule mean
    cent = u - mean
    # Grouped variance: (cent^2) @ Gs broadcasts each capsule's E[cent^2] back
    # onto all of its lanes.  Squared terms are non-negative -> safe in bf16.
    var = jnp.dot((cent * cent).astype(jnp.bfloat16), g_ref[...],
                  preferred_element_type=jnp.float32)
    scale = p_ref[2:3, :] * lax.rsqrt(var + EPS)              # rsqrt -> EUP
    o_ref[...] = (cent * scale + p_ref[3:4, :]).astype(o_ref.dtype)


def _row_tiling(rows, cap=1024):
    """Pick (tile, grid_len, padded_rows).

    Tiles are multiples of 8 (sublane rule).  Prefer an exact divisor with an
    EVEN number of grid steps (>= 2) so v7x's two TensorCores both stay busy;
    otherwise fall back to a padded grid (never one giant block)."""
    tm_max = min(cap, rows)
    best = None
    start = tm_max - (tm_max % 8)
    for tm in range(start, 7, -8):
        if rows % tm == 0:
            g = rows // tm
            if g >= 2:
                if g % 2 == 0:
                    return tm, g, rows          # exact, even grid
                if best is None:
                    best = (tm, g, rows)        # exact, odd grid
    if best is not None:
        return best
    # Awkward rows: pad up to a multiple of a bounded tile, >= 2 steps if possible.
    half = pl.cdiv(rows, 2)
    tm = max(8, min(cap, ((half + 7) // 8) * 8))
    grid = pl.cdiv(rows, tm)
    if grid > 1 and grid % 2 == 1:
        grid += 1                                # even grid for v7x megacore
    return tm, grid, grid * tm


def primary_caps_forward(x, w_conv, b_conv, gamma, beta,
                         num_caps, caps_dim, kernel_size):
    B, C, H, W = x.shape
    K = kernel_size
    Hp, Wp = H // K, W // K
    R = B * Hp * Wp
    CKK = C * K * K
    OC = num_caps * caps_dim
    inv_d = 1.0 / caps_dim

    # --- glue: patch extraction in bf16 (halves the transpose pass traffic) ---
    xb = x.astype(jnp.bfloat16)
    patches = xb.reshape(B, C, Hp, K, Wp, K)
    patches = patches.transpose(0, 2, 4, 1, 3, 5).reshape(R, CKK)

    # --- glue: fused weights.  Column oc = (capsule n, dim d). ---
    w_mat = w_conv.reshape(OC, CKK).T.astype(jnp.float32)          # (CKK, OC)
    b_row = b_conv.reshape(1, OC).astype(jnp.float32)
    # Block-diagonal ones: G[i, j] = 1 iff columns i, j are in the same capsule.
    g_mat = jnp.kron(jnp.eye(num_caps, dtype=jnp.float32),
                     jnp.ones((caps_dim, caps_dim), jnp.float32))
    # Fold the per-capsule mean into the main matmul: extra OC columns.
    w_mean = (w_mat @ g_mat) * inv_d
    w_aug = jnp.concatenate([w_mat, w_mean], axis=1).astype(jnp.bfloat16)
    b_mean = (b_row @ g_mat) * inv_d
    # Group-average matrix for the variance matmul (exact 0 / 1/d entries).
    g_scaled = (g_mat * inv_d).astype(jnp.bfloat16)
    # All small per-column params stacked into one resident block.
    gamma_row = jnp.tile(gamma.astype(jnp.float32), num_caps).reshape(1, OC)
    beta_row = jnp.tile(beta.astype(jnp.float32), num_caps).reshape(1, OC)
    params = jnp.concatenate([b_row, b_mean, gamma_row, beta_row], axis=0)  # (4, OC)

    TM, grid_len, Rp = _row_tiling(R)
    if Rp != R:
        patches = jnp.pad(patches, ((0, Rp - R), (0, 0)))

    out = pl.pallas_call(
        functools.partial(primary_caps_kernel, oc=OC),
        out_shape=jax.ShapeDtypeStruct((Rp, OC), jnp.bfloat16),
        grid_spec=pltpu.PrefetchScalarGridSpec(
            num_scalar_prefetch=0,
            grid=(grid_len,),
            in_specs=[
                pl.BlockSpec((TM, CKK), lambda r: (r, 0)),       # patch row tile
                pl.BlockSpec((CKK, 2 * OC), lambda r: (0, 0)),   # fused weights
                pl.BlockSpec((OC, OC), lambda r: (0, 0)),        # group-avg matrix
                pl.BlockSpec((4, OC), lambda r: (0, 0)),         # bias/gamma/beta
            ],
            out_specs=pl.BlockSpec((TM, OC), lambda r: (r, 0)),
        ),
        compiler_params=pltpu.CompilerParams(
            dimension_semantics=("parallel",)),  # megacore splits row tiles
    )(patches, w_aug, g_scaled, params)

    # --- glue: drop padding, reorder (b, hw, n, d) -> (B, n*hw, d) in bf16 ---
    out = out[:R].reshape(B, Hp * Wp, num_caps, caps_dim)
    out = out.transpose(0, 2, 1, 3).reshape(B, num_caps * Hp * Wp, caps_dim)
    return out.astype(jnp.float32)   # match the PyTorch module's f32 output


def primary_caps_reference(x, w_conv, b_conv, gamma, beta,
                           num_caps, caps_dim, K):
    """Pure-JAX f32 reference matching the PyTorch forward exactly."""
    u = lax.conv_general_dilated(
        x, w_conv, window_strides=(K, K), padding="VALID",
        dimension_numbers=("NCHW", "OIHW", "NCHW"),
        precision=lax.Precision.HIGHEST)
    u = u + b_conv[None, :, None, None]
    B = x.shape[0]
    Hp, Wp = u.shape[-2], u.shape[-1]
    u = u.reshape(B, num_caps, caps_dim, Hp, Wp).transpose(0, 1, 3, 4, 2)
    u = u.reshape(B, -1, caps_dim)
    mean = u.mean(-1, keepdims=True)
    var = ((u - mean) ** 2).mean(-1, keepdims=True)
    return (u - mean) / jnp.sqrt(var + EPS) * gamma + beta


if __name__ == "__main__":
    # Small shapes consistent with the module.
    B, C, H, W = 2, 4, 16, 16
    num_caps, caps_dim, K = 8, 16, 4

    key = jax.random.PRNGKey(0)
    kx, kw, kb = jax.random.split(key, 3)
    x = jax.random.normal(kx, (B, C, H, W), jnp.float32)

    OC = num_caps * caps_dim
    fan_in = C * K * K
    # Deterministic synthetic parameters (shapes per the module __init__).
    w_conv = jax.random.normal(kw, (OC, C, K, K), jnp.float32) / jnp.sqrt(fan_in)
    b_conv = 0.1 * jax.random.normal(kb, (OC,), jnp.float32)
    gamma = jnp.ones((caps_dim,), jnp.float32)   # LayerNorm default init
    beta = jnp.zeros((caps_dim,), jnp.float32)

    out = primary_caps_forward(x, w_conv, b_conv, gamma, beta,
                               num_caps, caps_dim, K)
    out = jax.block_until_ready(out)

    ref = primary_caps_reference(x, w_conv, b_conv, gamma, beta,
                                 num_caps, caps_dim, K)
    assert out.shape == (B, num_caps * (H // K) * (W // K), caps_dim), out.shape
    # Deviation vs. the exact f32 conv reference is dominated by bf16 I/O
    # quantization (bf16 patches/weights on the MXU + bf16 output writeback),
    # a deliberate perf choice; LayerNorm statistics are accumulated in f32.
    err = float(jnp.max(jnp.abs(out - ref)))
    assert err < 3e-2, err

    print("KERNEL_OK")
</pallas_src>

<mosaic_0001>
module attributes {stable_mosaic.version = 11 : i64} {
  func.func @primary_caps_kernel(%arg0: i32, %arg1: memref<16x64xbf16, #tpu.memory_space<vmem>>, %arg2: memref<64x256xbf16, #tpu.memory_space<vmem>>, %arg3: memref<128x128xbf16, #tpu.memory_space<vmem>>, %arg4: memref<4x128xf32, #tpu.memory_space<vmem>>, %arg5: memref<16x128xbf16, #tpu.memory_space<vmem>>) attributes {dimension_semantics = [#tpu.dimension_semantics<parallel>], iteration_bounds = array<i64: 2>, scalar_prefetch = 0 : i64, scratch_operands = 0 : i64, tpu.core_type = #tpu.core_type<tc>, window_params = [{transform_indices = @transform_0, window_bounds = array<i64: 16, 64>}, {pipeline_mode = #tpu.pipeline_mode<synchronous>, transform_indices = @transform_1, window_bounds = array<i64: 64, 256>}, {pipeline_mode = #tpu.pipeline_mode<synchronous>, transform_indices = @transform_2, window_bounds = array<i64: 128, 128>}, {pipeline_mode = #tpu.pipeline_mode<synchronous>, transform_indices = @transform_3, window_bounds = array<i64: 4, 128>}, {transform_indices = @transform_4, window_bounds = array<i64: 16, 128>}]} {
    %c0 = arith.constant 0 : index
    %c0_0 = arith.constant 0 : index
    %0 = vector.load %arg1[%c0, %c0_0] : memref<16x64xbf16, #tpu.memory_space<vmem>>, vector<16x64xbf16>
    %c0_1 = arith.constant 0 : index
    %c0_2 = arith.constant 0 : index
    %1 = vector.load %arg2[%c0_1, %c0_2] : memref<64x256xbf16, #tpu.memory_space<vmem>>, vector<64x256xbf16>
    %cst = arith.constant dense<0.000000e+00> : vector<16x256xf32>
    %2 = tpu.matmul %0, %1, %cst {dimension_numbers = #tpu.dot_dimension_numbers<[1], [0], [0], [1], [0, 0, 1, 1], [], []>} : vector<16x64xbf16>, vector<64x256xbf16>, vector<16x256xf32> -> vector<16x256xf32>
    %3 = vector.extract_strided_slice %2 {offsets = [0, 0], sizes = [16, 128], strides = [1, 1]} : vector<16x256xf32> to vector<16x128xf32>
    %c0_3 = arith.constant 0 : index
    %c0_4 = arith.constant 0 : index
    %4 = vector.load %arg4[%c0_3, %c0_4] : memref<4x128xf32, #tpu.memory_space<vmem>>, vector<1x128xf32>
    %5 = vector.broadcast %4 : vector<1x128xf32> to vector<16x128xf32>
    %6 = arith.addf %3, %5 : vector<16x128xf32>
    %7 = vector.extract_strided_slice %2 {offsets = [0, 128], sizes = [16, 128], strides = [1, 1]} : vector<16x256xf32> to vector<16x128xf32>
    %c1 = arith.constant 1 : index
    %c0_5 = arith.constant 0 : index
    %8 = vector.load %arg4[%c1, %c0_5] : memref<4x128xf32, #tpu.memory_space<vmem>>, vector<1x128xf32>
    %9 = vector.broadcast %8 : vector<1x128xf32> to vector<16x128xf32>
    %10 = arith.addf %7, %9 : vector<16x128xf32>
    %11 = arith.subf %6, %10 : vector<16x128xf32>
    %12 = arith.mulf %11, %11 : vector<16x128xf32>
    %13 = arith.truncf %12 : vector<16x128xf32> to vector<16x128xbf16>
    %c0_6 = arith.constant 0 : index
    %c0_7 = arith.constant 0 : index
    %14 = vector.load %arg3[%c0_6, %c0_7] : memref<128x128xbf16, #tpu.memory_space<vmem>>, vector<128x128xbf16>
    %cst_8 = arith.constant dense<0.000000e+00> : vector<16x128xf32>
    %15 = tpu.matmul %13, %14, %cst_8 {dimension_numbers = #tpu.dot_dimension_numbers<[1], [0], [0], [1], [0, 0, 1, 1], [], []>} : vector<16x128xbf16>, vector<128x128xbf16>, vector<16x128xf32> -> vector<16x128xf32>
    %c2 = arith.constant 2 : index
    %c0_9 = arith.constant 0 : index
    %16 = vector.load %arg4[%c2, %c0_9] : memref<4x128xf32, #tpu.memory_space<vmem>>, vector<1x128xf32>
    %cst_10 = arith.constant 9.99999974E-6 : f32
    %17 = vector.broadcast %cst_10 : f32 to vector<16x128xf32>
    %18 = arith.addf %15, %17 : vector<16x128xf32>
    %19 = math.rsqrt %18 : vector<16x128xf32>
    %20 = vector.broadcast %16 : vector<1x128xf32> to vector<16x128xf32>
    %21 = arith.mulf %20, %19 : vector<16x128xf32>
    %22 = arith.mulf %11, %21 : vector<16x128xf32>
    %c3 = arith.constant 3 : index
    %c0_11 = arith.constant 0 : index
    %23 = vector.load %arg4[%c3, %c0_11] : memref<4x128xf32, #tpu.memory_space<vmem>>, vector<1x128xf32>
    %24 = vector.broadcast %23 : vector<1x128xf32> to vector<16x128xf32>
    %25 = arith.addf %22, %24 : vector<16x128xf32>
    %26 = arith.truncf %25 : vector<16x128xf32> to vector<16x128xbf16>
    %c0_12 = arith.constant 0 : index
    %c0_13 = arith.constant 0 : index
    %27 = vector.load %arg5[%c0_12, %c0_13] : memref<16x128xbf16, #tpu.memory_space<vmem>>, vector<16x128xbf16>
    tpu.vector_store %arg5[%c0_12, %c0_13], %26 {strides = array<i32>} : memref<16x128xbf16, #tpu.memory_space<vmem>>, vector<16x128xbf16>,
    return
  }
  func.func @transform_0(%arg0: i32) -> (i32, i32) {
    %c0_i32 = arith.constant 0 : i32
    %c0_i32_0 = arith.constant 0 : i32
    return %arg0, %c0_i32 : i32, i32
  }
  func.func @transform_1(%arg0: i32) -> (i32, i32) {
    %c0_i32 = arith.constant 0 : i32
    %c0_i32_0 = arith.constant 0 : i32
    %c0_i32_1 = arith.constant 0 : i32
    return %c0_i32, %c0_i32_0 : i32, i32
  }
  func.func @transform_2(%arg0: i32) -> (i32, i32) {
    %c0_i32 = arith.constant 0 : i32
    %c0_i32_0 = arith.constant 0 : i32
    %c0_i32_1 = arith.constant 0 : i32
    return %c0_i32, %c0_i32_0 : i32, i32
  }
  func.func @transform_3(%arg0: i32) -> (i32, i32) {
    %c0_i32 = arith.constant 0 : i32
    %c0_i32_0 = arith.constant 0 : i32
    %c0_i32_1 = arith.constant 0 : i32
    return %c0_i32, %c0_i32_0 : i32, i32
  }
  func.func @transform_4(%arg0: i32) -> (i32, i32) {
    %c0_i32 = arith.constant 0 : i32
    %c0_i32_0 = arith.constant 0 : i32
    return %arg0, %c0_i32 : i32, i32
  }
}

</mosaic_0001>

<llo_original>
// kernel: tpu_custom_call.1
$region0: #{tpu_custom_call.1}
  #allocation0 [shape = 'u32[]', space=smem, size = 0x4, offset = 0x4, fixed_abs, tag = 'smem constant byte address 0x4 - core index']
  #allocation1 [shape = 'u32[144,128]{1,0:T(1,128)}', space=vmem, size = 0x12000, scoped, tag = 'internal scratch']
  %s0 = inlined_call_operand.hbm [shape: bf16[32,64], index: 0, kind: input, shape index: {}]
  %s1 = inlined_call_operand.hbm [shape: bf16[64,256], index: 1, kind: input, shape index: {}]
  %s2 = inlined_call_operand.hbm [shape: bf16[128,128], index: 2, kind: input, shape index: {}]
  %s3 = inlined_call_operand.vmem [shape: f32[4,128], index: 3, kind: input, shape index: {}]
  %s4 = inlined_call_operand.hbm [shape: bf16[32,128], index: 4, kind: output, shape index: {}]
  %s5 = sld [smem:[#allocation0]]
  $region61: #{tpu_custom_call.1} parent=0
    _
  %s7 = ssub.s32 1, %s5
  %s8 = scalar_select 0, %s7, %s5
  $region1: #{tpu_custom_call.1} parent=0
    #allocation2 [shape = 'u8[8192]{0}', space=vmem, size = 0x2000, scoped, tag = 'input window, operand 0']
    #allocation3 [shape = 's32[2]{0}', space=sflag, size = 0x8, scoped, tag = 'scoped memory for tpu_custom_call.1']
    #allocation4 [shape = 's32[2]{0}', space=sflag, size = 0x8, scoped, tag = 'scoped memory for tpu_custom_call.1']
    #allocation5 [shape = 'u8[32768]{0}', space=vmem, size = 0x8000, scoped, tag = 'input window, operand 1, single buffered']
    #allocation6 [shape = 's32[1]{0}', space=sflag, size = 0x4, scoped, tag = 'scoped memory for tpu_custom_call.1']
    #allocation7 [shape = 'u8[32768]{0}', space=vmem, size = 0x8000, scoped, tag = 'input window, operand 2, single buffered']
    #allocation8 [shape = 'u8[8192]{0}', space=vmem, size = 0x2000, scoped, tag = 'output window, operand 0']
    %9 = vsyncpa [#allocation3], 0
    %s10 = scalar_lea.sflag [#allocation3], 1
    %11 = vsyncpa %s10, 0
    %12 = vsyncpa [#allocation6], 0
    %13 = vsyncpa [#allocation4], 0
    %s14 = scalar_lea.sflag [#allocation4], 1
    %15 = vsyncpa %s14, 0
    loop: start=0, step=1, limit=4
    $region2: #{tpu_custom_call.1} parent=1 // loop_pre_header
      _
    $region3: #{tpu_custom_call.1} parent=1 // loop_header
      %s17 = sphi 0, %s21
      %p18 = scmp.ge.s32.totalorder %s17, 4
      %s27 = sphi 0, %s29
      %s30 = sphi 0, %s27
      %s31 = sphi 0, %s30
      %s47 = sphi 0, %s31
      %s51 = sphi 0, %s51
      %s53 = sphi 0, %s51
      %s54 = sphi 0, %s53
      %s68 = sphi 0, %s54
      %s72 = sphi 0, %s72
      %s74 = sphi 0, %s72
      %s75 = sphi 0, %s74
      %s89 = sphi 0, %s75
      %s93 = sphi 0, %s93
      %s95 = sphi 0, %s93
      %s96 = sphi 0, %s95
      %s110 = sphi 0, %s96
      %s116 = sphi 0, %s118
      %s119 = sphi 0, %s116
      %s120 = sphi 0, %s119
      %s136 = sphi 0, %s120
    $region4: #{tpu_custom_call.1} parent=1 // loop_header_branch
      %20 = sbr.rel (%p18) target = $region8
    $region5: #{tpu_custom_call.1} parent=1 // loop_body
      %s22 = ssub.s32 %s17, 1
      %s23 = ssub.s32 %s17, 2
      %s24 = sadd.s32 %s17, 1
      %s25 = ssub.s32 %s17, %s24
      %p26 = scmp.eq.s32.totalorder %s25, 0
      %s28 = sadd.s32 %s27, 1
      %s29 = scalar_select %p26, %s27, %s28
      %p32 = pneg %p26
      %p33 = scmp.eq.s32.totalorder %s17, 1
      %p34 = por %p32, %p33
      %p35 = scmp.ne.s32.totalorder %s27, %s30
      %p36 = scmp.eq.s32.totalorder %s17, 0
      %p37 = por %p35, %p36
      %p38 = scmp.ne.s32.totalorder %s27, %s30
      %p39 = scmp.eq.s32.totalorder %s22, 1
      %p40 = por %p38, %p39
      %p41 = scmp.ne.s32.totalorder %s30, %s31
      %p42 = scmp.eq.s32.totalorder %s22, 0
      %p43 = por %p41, %p42
      %p44 = scmp.ne.s32.totalorder %s30, %s31
      %p45 = scmp.eq.s32.totalorder %s23, 1
      %p46 = por %p44, %p45
      %p48 = scmp.ne.s32.totalorder %s31, %s47
      %p49 = scmp.eq.s32.totalorder %s23, 0
      %p50 = por %p48, %p49
      %s52 = sadd.s32 %s51, 1
      %p55 = scmp.eq.s32.totalorder %s17, 1
      %p56 = scmp.ne.s32.totalorder %s51, %s53
      %p57 = scmp.eq.s32.totalorder %s17, 0
      %p58 = por %p56, %p57
      %p59 = scmp.ne.s32.totalorder %s51, %s53
      %p60 = scmp.eq.s32.totalorder %s22, 1
      %p61 = por %p59, %p60
      %p62 = scmp.ne.s32.totalorder %s53, %s54
      %p63 = scmp.eq.s32.totalorder %s22, 0
      %p64 = por %p62, %p63
      %p65 = scmp.ne.s32.totalorder %s53, %s54
      %p66 = scmp.eq.s32.totalorder %s23, 1
      %p67 = por %p65, %p66
      %p69 = scmp.ne.s32.totalorder %s54, %s68
      %p70 = scmp.eq.s32.totalorder %s23, 0
      %p71 = por %p69, %p70
      %s73 = sadd.s32 %s72, 1
      %p76 = scmp.eq.s32.totalorder %s17, 1
      %p77 = scmp.ne.s32.totalorder %s72, %s74
      %p78 = scmp.eq.s32.totalorder %s17, 0
      %p79 = por %p77, %p78
      %p80 = scmp.ne.s32.totalorder %s72, %s74
      %p81 = scmp.eq.s32.totalorder %s22, 1
      %p82 = por %p80, %p81
      %p83 = scmp.ne.s32.totalorder %s74, %s75
      %p84 = scmp.eq.s32.totalorder %s22, 0
      %p85 = por %p83, %p84
      %p86 = scmp.ne.s32.totalorder %s74, %s75
      %p87 = scmp.eq.s32.totalorder %s23, 1
      %p88 = por %p86, %p87
      %p90 = scmp.ne.s32.totalorder %s75, %s89
      %p91 = scmp.eq.s32.totalorder %s23, 0
      %p92 = por %p90, %p91
      %s94 = sadd.s32 %s93, 1
      %p97 = scmp.eq.s32.totalorder %s17, 1
      %p98 = scmp.ne.s32.totalorder %s93, %s95
      %p99 = scmp.eq.s32.totalorder %s17, 0
      %p100 = por %p98, %p99
      %p101 = scmp.ne.s32.totalorder %s93, %s95
      %p102 = scmp.eq.s32.totalorder %s22, 1
      %p103 = por %p101, %p102
      %p104 = scmp.ne.s32.totalorder %s95, %s96
      %p105 = scmp.eq.s32.totalorder %s22, 0
      %p106 = por %p104, %p105
      %p107 = scmp.ne.s32.totalorder %s95, %s96
      %p108 = scmp.eq.s32.totalorder %s23, 1
      %p109 = por %p107, %p108
      %p111 = scmp.ne.s32.totalorder %s96, %s110
      %p112 = scmp.eq.s32.totalorder %s23, 0
      %p113 = por %p111, %p112
      %s114 = ssub.s32 %s17, %s24
      %p115 = scmp.eq.s32.totalorder %s114, 0
      %s117 = sadd.s32 %s116, 1
      %s118 = scalar_select %p115, %s116, %s117
      %p121 = pneg %p115
      %p122 = scmp.eq.s32.totalorder %s17, 1
      %p123 = por %p121, %p122
      %p124 = scmp.ne.s32.totalorder %s116, %s119
      %p125 = scmp.eq.s32.totalorder %s17, 0
      %p126 = por %p124, %p125
      %p127 = scmp.ne.s32.totalorder %s116, %s119
      %p128 = scmp.eq.s32.totalorder %s22, 1
      %p129 = por %p127, %p128
      %p130 = scmp.ne.s32.totalorder %s119, %s120
      %p131 = scmp.eq.s32.totalorder %s22, 0
      %p132 = por %p130, %p131
      %p133 = scmp.ne.s32.totalorder %s119, %s120
      %p134 = scmp.eq.s32.totalorder %s23, 1
      %p135 = por %p133, %p134
      %p137 = scmp.ne.s32.totalorder %s120, %s136
      %p138 = scmp.eq.s32.totalorder %s23, 0
      %p139 = por %p137, %p138
      %p140 = scmp.le.s32.totalorder 1, %s17
      %p141 = scmp.lt.s32.totalorder %s17, 3
      %p142 = pnand %p140, %p141
      %p143 = pneg %p142
      // Predicated region
      $region9: #{tpu_custom_call.1} parent=5 // pred_check
        _
      $region10: #{tpu_custom_call.1} parent=5 // pred_check_branch
        %145 = sbr.rel (%p142) target = $region12
      $region11: #{tpu_custom_call.1} parent=5 // pred_region
        %s146 = ssub.s32 %s17, 1
        // Predicated region
        $region13: #{tpu_custom_call.1} parent=11 // pred_check
          %p147 = pneg %p64
        $region14: #{tpu_custom_call.1} parent=11 // pred_check_branch
          %149 = sbr.rel (%p147) target = $region16
        $region15: #{tpu_custom_call.1} parent=11 // pred_region
          %s151 = ssub.s32 1024, 1024
          %152 = vsyncadd [#allocation6], %s151
          %s153 = sshll.u32 [#allocation5], 4
          %s154 = int_to_ptr.vmem [resolvable:$true] %s153
          %159 = dma.hbm_to_vmem [thread:$0]  %s1, 1024, %s154, [#allocation6], 128, 128, 8
        $region16: #{tpu_custom_call.1} parent=11 // pred_fallthru
          _
        // Predicated region
        $region17: #{tpu_custom_call.1} parent=11 // pred_check
          %p160 = pneg %p85
        $region18: #{tpu_custom_call.1} parent=11 // pred_check_branch
          %162 = sbr.rel (%p160) target = $region20
        $region19: #{tpu_custom_call.1} parent=11 // pred_region
          %s164 = ssub.s32 1024, 1024
          %165 = vsyncadd [#allocation6], %s164
          %s166 = sshll.u32 [#allocation7], 4
          %s167 = int_to_ptr.vmem [resolvable:$true] %s166
          %172 = dma.hbm_to_vmem [thread:$0]  %s2, 1024, %s167, [#allocation6], 64, 64, 4
        $region20: #{tpu_custom_call.1} parent=11 // pred_fallthru
          _
        // Predicated region
        $region21: #{tpu_custom_call.1} parent=11 // pred_check
          %p173 = pneg %p106
        $region22: #{tpu_custom_call.1} parent=11 // pred_check_branch
          %175 = sbr.rel (%p173) target = $region24
        $region23: #{tpu_custom_call.1} parent=11 // pred_region
          _
        $region24: #{tpu_custom_call.1} parent=11 // pred_fallthru
          _
      $region12: #{tpu_custom_call.1} parent=5 // pred_fallthru
        _
      %p176 = scmp.lt.s32.totalorder %s17, 2
      // Predicated region
      $region25: #{tpu_custom_call.1} parent=5 // pred_check
        %p177 = pneg %p176
      $region26: #{tpu_custom_call.1} parent=5 // pred_check_branch
        %179 = sbr.rel (%p177) target = $region28
      $region27: #{tpu_custom_call.1} parent=5 // pred_region
        // Predicated region
        $region29: #{tpu_custom_call.1} parent=27 // pred_check
          %p180 = pneg %p37
        $region30: #{tpu_custom_call.1} parent=27 // pred_check_branch
          %182 = sbr.rel (%p180) target = $region32
        $region31: #{tpu_custom_call.1} parent=27 // pred_region
          %s183 = sand.u32 %s27, 1
          %s184 = scalar_lea.sflag [#allocation3], %s183
          %s185 = sand.u32 %s27, 1
          %s186 = smul.addr %s185, 8
          %s187 = scalar_lea.vmem [#allocation2], %s186
          %s188 = smul.u32 2, %s17
          %s190 = ssub.s32 128, 128
          %191 = vsyncadd %s184, %s190
          %s192 = smul.addr %s188, 64
          %s193 = scalar_lea.hbm %s0, %s192
          %s194 = sshll.u32 %s187, 4
          %s195 = int_to_ptr.vmem [resolvable:$true] %s194
          %200 = dma.hbm_to_vmem [thread:$0]  %s193, 128, %s195, %s184, 64, 64, 4
        $region32: #{tpu_custom_call.1} parent=27 // pred_fallthru
          _
      $region28: #{tpu_custom_call.1} parent=5 // pred_fallthru
        _
      %p201 = scmp.le.s32.totalorder 1, %s17
      %p202 = scmp.lt.s32.totalorder %s17, 3
      %p203 = pnand %p201, %p202
      %p204 = pneg %p203
      // Predicated region
      $region33: #{tpu_custom_call.1} parent=5 // pred_check
        _
      $region34: #{tpu_custom_call.1} parent=5 // pred_check_branch
        %206 = sbr.rel (%p203) target = $region36
      $region35: #{tpu_custom_call.1} parent=5 // pred_region
        %s207 = ssub.s32 %s17, 1
        %s208 = sand.u32 %s30, 1
        %s209 = scalar_lea.sflag [#allocation3], %s208
        %s210 = sand.u32 %s30, 1
        %s211 = smul.addr %s210, 8
        %s212 = scalar_lea.vmem [#allocation2], %s211
        // Predicated region
        $region37: #{tpu_custom_call.1} parent=35 // pred_check
          %p213 = pneg %p43
        $region38: #{tpu_custom_call.1} parent=35 // pred_check_branch
          %215 = sbr.rel (%p213) target = $region40
        $region39: #{tpu_custom_call.1} parent=35 // pred_region
          %216 = dma.done %s209, 128
        $region40: #{tpu_custom_call.1} parent=35 // pred_fallthru
          _
        // Predicated region
        $region41: #{tpu_custom_call.1} parent=35 // pred_check
          %p217 = pneg %p64
        $region42: #{tpu_custom_call.1} parent=35 // pred_check_branch
          %219 = sbr.rel (%p217) target = $region44
        $region43: #{tpu_custom_call.1} parent=35 // pred_region
          %220 = dma.done [#allocation6], 1024
        $region44: #{tpu_custom_call.1} parent=35 // pred_fallthru
          _
        // Predicated region
        $region45: #{tpu_custom_call.1} parent=35 // pred_check
          %p221 = pneg %p85
        $region46: #{tpu_custom_call.1} parent=35 // pred_check_branch
          %223 = sbr.rel (%p221) target = $region48
        $region47: #{tpu_custom_call.1} parent=35 // pred_region
          %224 = dma.done [#allocation6], 1024
        $region48: #{tpu_custom_call.1} parent=35 // pred_fallthru
          _
        %s225 = sand.u32 %s30, 1
        %s226 = scalar_lea.sflag [#allocation3], %s225
        %s227 = sand.u32 %s30, 1
        %s228 = smul.addr %s227, 8
        %s229 = scalar_lea.vmem [#allocation2], %s228
        %p230 = pneg %p43
        %p231 = pneg %p40
        %p232 = pneg %p64
        %p233 = pneg %p61
        %p234 = pneg %p85
        %p235 = pneg %p82
        %p236 = pneg %p106
        %p237 = pneg %p103
        %p238 = pneg %p132
        %p239 = pneg %p129
        %s240 = sand.u32 %s119, 1
        %s241 = scalar_lea.sflag [#allocation4], %s240
        %s242 = sand.u32 %s119, 1
        %s243 = smul.addr %s242, 8
        %s244 = scalar_lea.vmem [#allocation8], %s243
        %s245 = smul.u32 2, %s22
        %s246 = smul.u32 2, %s22
        %v248 = vld [vmem:[%s212] sm:$0xf]
        %v249 = vld [vmem:[%s212 + $0x4] sm:$0xf]
        %v250 = vld [vmem:[#allocation5] sm:$0xff]
        %v251 = vld [vmem:[#allocation5 + $0x8] sm:$0xff]
        %v252 = vld [vmem:[#allocation5 + $0x10] sm:$0xff]
        %v253 = vld [vmem:[#allocation5 + $0x18] sm:$0xff]
        %v254 = vld [vmem:[#allocation5 + $0x20] sm:$0xff]
        %v255 = vld [vmem:[#allocation5 + $0x28] sm:$0xff]
        %v256 = vld [vmem:[#allocation5 + $0x30] sm:$0xff]
        %v257 = vld [vmem:[#allocation5 + $0x38] sm:$0xff]
        %v260 = vunpack.c.l.b16 %v248
        %v261 = vunpack.c.l.b16 %v249
        %v262 = vpack.c.b16 %v261, %v260
        %v271 = vunpack.c.l.b16 %v250
        %v272 = vunpack.c.h.b16 %v250
        %v273 = vunpack.c.l.b16 %v251
        %v274 = vunpack.c.h.b16 %v251
        %v275 = vunpack.c.l.b16 %v252
        %v276 = vunpack.c.h.b16 %v252
        %v277 = vunpack.c.l.b16 %v253
        %v278 = vunpack.c.h.b16 %v253
        %v279 = vunpack.c.l.b16 %v254
        %v280 = vunpack.c.h.b16 %v254
        %v281 = vunpack.c.l.b16 %v255
        %v282 = vunpack.c.h.b16 %v255
        %v283 = vunpack.c.l.b16 %v256
        %v284 = vunpack.c.h.b16 %v256
        %v285 = vunpack.c.l.b16 %v257
        %v286 = vunpack.c.h.b16 %v257
        %v287 = vpack.c.b16 %v273, %v271
        %v288 = vpack.c.b16 %v274, %v272
        %v289 = vpack.c.b16 %v277, %v275
        %v290 = vpack.c.b16 %v278, %v276
        %v291 = vpack.c.b16 %v281, %v279
        %v292 = vpack.c.b16 %v282, %v280
        %v293 = vpack.c.b16 %v285, %v283
        %v294 = vpack.c.b16 %v286, %v284
        %vm303 = vcmask 523264
        %v305 = vsel %vm303, %v262, 0
        %307 = vmatprep.subr.bf16.mxu0 0
        %308 = vmatpush1.bf16.msra.mxu0 0
        %309 = vmatprep.subr.bf16.mxu0 0
        %310 = vmatpush1.bf16.msra.mxu0 0
        %311 = vmatprep.subr.bf16.mxu0 0
        %312 = vmatpush1.bf16.msra.mxu0 0
        %313 = vmatprep.subr.bf16.mxu0 0
        %314 = vmatpush1.bf16.msra.mxu0 0
        %315 = vmatprep.subr.bf16.mxu0 %v294
        %316 = vmatpush1.bf16.msra.mxu0 %v293
        %317 = vmatprep.subr.bf16.mxu0 %v292
        %318 = vmatpush1.bf16.msra.mxu0 %v291
        %319 = vmatprep.subr.bf16.mxu0 %v290
        %320 = vmatpush1.bf16.msra.mxu0 %v289
        %321 = vmatprep.subr.bf16.mxu0 %v288
        %322 = vmatpush1.bf16.msra.mxu0 %v287
        %323 = vmatprep.subr.bf16.mxu0 0
        %324 = vmatpush2.bf16.msra.mxu0 0
        %325 = vmatprep.subr.bf16.mxu0 0
        %326 = vmatpush2.bf16.msra.mxu0 0
        %327 = vmatprep.subr.bf16.mxu0 0
        %328 = vmatpush2.bf16.msra.mxu0 0
        %329 = vmatprep.subr.bf16.mxu0 0
        %330 = vmatpush2.bf16.msra.mxu0 0
        %331 = vmatprep.subr.bf16.mxu0 0
        %332 = vmatpush2.bf16.msra.mxu0 0
        %333 = vmatprep.subr.bf16.mxu0 0
        %334 = vmatpush2.bf16.msra.mxu0 0
        %335 = vmatprep.subr.bf16.mxu0 0
        %336 = vmatpush2.bf16.msra.mxu0 0
        %337 = vmatprep.subr.bf16.mxu0 0
        %338 = vmatpush2.bf16.msra.mxu0 0
        %339 = vmatprep.mubr.bf16.mxu0 0
        %340 = vmatmul.mubr.bf16.gmra.mxu0 %v305
        %v341 = vpop.f32.mrf.mxu0
        %v342 = vadd.f32 0.0, %v341
        %v343 = vpop.f32.mrf.mxu0
        %v344 = vadd.f32 0.0, %v343
        %v345 = vpop.f32.mrf.mxu0
        %v346 = vadd.f32 0.0, %v345
        %v347 = vpop.f32.mrf.mxu0
        %v348 = vadd.f32 0.0, %v347
        %349 = vdwg.mxu0
        %v350 = vld [vmem:[%s3] sm:$0x1]
        %v351 = vlaneseq
        %v352 = vshrl.u32 %v351, 7
        %v353 = vsub.s32 0, %v352
        %v354 = vrot.slane %v350, %v353
        %v355 = vadd.f32 %v342, %v354
        %v356 = vadd.f32 %v346, %v354
        %v357 = vld [vmem:[%s3 + $0x1] sm:$0x1]
        %v358 = vlaneseq
        %v359 = vshrl.u32 %v358, 7
        %v360 = vsub.s32 0, %v359
        %v361 = vrot.slane %v357, %v360
        %v362 = vadd.f32 %v344, %v361
        %v363 = vadd.f32 %v348, %v361
        %v364 = vsub.f32 %v355, %v362
        %v365 = vsub.f32 %v356, %v363
        %v366 = vmul.f32 %v364, %v364
        %v367 = vmul.f32 %v365, %v365
        %v368 = vpack.c.bf16 %v367, %v366
        %v369 = vld [vmem:[#allocation7] sm:$0xf]
        %v370 = vld [vmem:[#allocation7 + $0x4] sm:$0xf]
        %v371 = vld [vmem:[#allocation7 + $0x8] sm:$0xf]
        %v372 = vld [vmem:[#allocation7 + $0xc] sm:$0xf]
        %v373 = vld [vmem:[#allocation7 + $0x10] sm:$0xf]
        %v374 = vld [vmem:[#allocation7 + $0x14] sm:$0xf]
        %v375 = vld [vmem:[#allocation7 + $0x18] sm:$0xf]
        %v376 = vld [vmem:[#allocation7 + $0x1c] sm:$0xf]
        %v377 = vld [vmem:[#allocation7 + $0x20] sm:$0xf]
        %v378 = vld [vmem:[#allocation7 + $0x24] sm:$0xf]
        %v379 = vld [vmem:[#allocation7 + $0x28] sm:$0xf]
        %v380 = vld [vmem:[#allocation7 + $0x2c] sm:$0xf]
        %v381 = vld [vmem:[#allocation7 + $0x30] sm:$0xf]
        %v382 = vld [vmem:[#allocation7 + $0x34] sm:$0xf]
        %v383 = vld [vmem:[#allocation7 + $0x38] sm:$0xf]
        %v384 = vld [vmem:[#allocation7 + $0x3c] sm:$0xf]
        %v385 = vld [vmem:[%s3 + $0x2] sm:$0x1]
        %v402 = vunpack.c.l.b16 %v369
        %v403 = vunpack.c.l.b16 %v370
        %v404 = vunpack.c.l.b16 %v371
        %v405 = vunpack.c.l.b16 %v372
        %v406 = vunpack.c.l.b16 %v373
        %v407 = vunpack.c.l.b16 %v374
        %v408 = vunpack.c.l.b16 %v375
        %v409 = vunpack.c.l.b16 %v376
        %v410 = vunpack.c.l.b16 %v377
        %v411 = vunpack.c.l.b16 %v378
        %v412 = vunpack.c.l.b16 %v379
        %v413 = vunpack.c.l.b16 %v380
        %v414 = vunpack.c.l.b16 %v381
        %v415 = vunpack.c.l.b16 %v382
        %v416 = vunpack.c.l.b16 %v383
        %v417 = vunpack.c.l.b16 %v384
        %v418 = vpack.c.b16 %v403, %v402
        %v419 = vpack.c.b16 %v405, %v404
        %v420 = vpack.c.b16 %v407, %v406
        %v421 = vpack.c.b16 %v409, %v408
        %v422 = vpack.c.b16 %v411, %v410
        %v423 = vpack.c.b16 %v413, %v412
        %v424 = vpack.c.b16 %v415, %v414
        %v425 = vpack.c.b16 %v417, %v416
        %434 = vmatprep.subr.bf16.mxu0 0
        %435 = vmatpush1.bf16.msra.mxu0 %v425
        %436 = vmatprep.subr.bf16.mxu0 0
        %437 = vmatpush1.bf16.msra.mxu0 %v424
        %438 = vmatprep.subr.bf16.mxu0 0
        %439 = vmatpush1.bf16.msra.mxu0 %v423
        %440 = vmatprep.subr.bf16.mxu0 0
        %441 = vmatpush1.bf16.msra.mxu0 %v422
        %442 = vmatprep.subr.bf16.mxu0 0
        %443 = vmatpush1.bf16.msra.mxu0 %v421
        %444 = vmatprep.subr.bf16.mxu0 0
        %445 = vmatpush1.bf16.msra.mxu0 %v420
        %446 = vmatprep.subr.bf16.mxu0 0
        %447 = vmatpush1.bf16.msra.mxu0 %v419
        %448 = vmatprep.subr.bf16.mxu0 0
        %449 = vmatpush1.bf16.msra.mxu0 %v418
        %450 = vmatprep.subr.bf16.mxu0 0
        %451 = vmatpush2.bf16.msra.mxu0 0
        %452 = vmatprep.subr.bf16.mxu0 0
        %453 = vmatpush2.bf16.msra.mxu0 0
        %454 = vmatprep.subr.bf16.mxu0 0
        %455 = vmatpush2.bf16.msra.mxu0 0
        %456 = vmatprep.subr.bf16.mxu0 0
        %457 = vmatpush2.bf16.msra.mxu0 0
        %458 = vmatprep.subr.bf16.mxu0 0
        %459 = vmatpush2.bf16.msra.mxu0 0
        %460 = vmatprep.subr.bf16.mxu0 0
        %461 = vmatpush2.bf16.msra.mxu0 0
        %462 = vmatprep.subr.bf16.mxu0 0
        %463 = vmatpush2.bf16.msra.mxu0 0
        %464 = vmatprep.subr.bf16.mxu0 0
        %465 = vmatpush2.bf16.msra.mxu0 0
        %466 = vmatprep.mubr.bf16.mxu0 0
        %467 = vmatmul.mubr.bf16.gmra.mxu0 %v368
        %v468 = vpop.f32.mrf.mxu0
        %v469 = vadd.f32 1e-05, %v468
        %v470 = vpop.f32.mrf.mxu0
        %v471 = vpop.f32.mrf.mxu0
        %v472 = vadd.f32 1e-05, %v471
        %v473 = vpop.f32.mrf.mxu0
        %474 = vdwg.mxu0
        %v475 = vrsqrt.pop %v469
        %v476 = vrsqrt.pop %v472
        %v477 = vlaneseq
        %v478 = vshrl.u32 %v477, 7
        %v479 = vsub.s32 0, %v478
        %v480 = vrot.slane %v385, %v479
        %v481 = vmul.f32 %v480, %v475
        %v482 = vmul.f32 %v480, %v476
        %v483 = vmul.f32 %v364, %v481
        %v484 = vmul.f32 %v365, %v482
        %v485 = vld [vmem:[%s3 + $0x3] sm:$0x1]
        %v486 = vlaneseq
        %v487 = vshrl.u32 %v486, 7
        %v488 = vsub.s32 0, %v487
        %v489 = vrot.slane %v485, %v488
        %v490 = vadd.f32 %v483, %v489
        %v491 = vadd.f32 %v484, %v489
        %v492 = vpack.c.bf16 %v491, %v490
        %v494 = vunpack.c.l.b16 %v492
        %v495 = vunpack.c.h.b16 %v492
        %v496 = vpack.c.b16 %v494, %v494
        %v497 = vpack.c.b16 %v495, %v495
        %500 = vst [vmem:[%s244] sm:$0xf] %v496
        %501 = vst [vmem:[%s244 + $0x4] sm:$0xf] %v497
        %s502 = sand.u32 %s119, 1
        %s503 = scalar_lea.sflag [#allocation4], %s502
        %s504 = sand.u32 %s119, 1
        %s505 = smul.addr %s504, 8
        %s506 = scalar_lea.vmem [#allocation8], %s505
        // Predicated region
        $region49: #{tpu_custom_call.1} parent=35 // pred_check
          %p507 = pneg %p129
        $region50: #{tpu_custom_call.1} parent=35 // pred_check_branch
          %509 = sbr.rel (%p507) target = $region52
        $region51: #{tpu_custom_call.1} parent=35 // pred_region
          %s510 = smul.u32 2, %s22
          %s512 = ssub.s32 128, 128
          %513 = vsyncadd %s503, %s512
          %s514 = smul.addr %s510, 64
          %s515 = scalar_lea.hbm %s4, %s514
          %s516 = sshll.u32 %s506, 4
          %s517 = int_to_ptr.vmem [resolvable:$true] %s516
          %522 = dma.vmem_to_hbm [thread:$0]  %s517, 128, %s515, %s503, 64, 64, 4
        $region52: #{tpu_custom_call.1} parent=35 // pred_fallthru
          _
      $region36: #{tpu_custom_call.1} parent=5 // pred_fallthru
        _
      %p523 = scmp.le.s32.totalorder 2, %s17
      // Predicated region
      $region53: #{tpu_custom_call.1} parent=5 // pred_check
        %p524 = pneg %p523
      $region54: #{tpu_custom_call.1} parent=5 // pred_check_branch
        %526 = sbr.rel (%p524) target = $region56
      $region55: #{tpu_custom_call.1} parent=5 // pred_region
        %s527 = ssub.s32 %s17, 2
        // Predicated region
        $region57: #{tpu_custom_call.1} parent=55 // pred_check
          %p528 = pneg %p135
        $region58: #{tpu_custom_call.1} parent=55 // pred_check_branch
          %530 = sbr.rel (%p528) target = $region60
        $region59: #{tpu_custom_call.1} parent=55 // pred_region
          %s531 = sand.u32 %s120, 1
          %s532 = scalar_lea.sflag [#allocation4], %s531
          %s533 = sand.u32 %s120, 1
          %s534 = smul.addr %s533, 8
          %s535 = scalar_lea.vmem [#allocation8], %s534
          %536 = dma.done %s532, 128
        $region60: #{tpu_custom_call.1} parent=55 // pred_fallthru
          _
      $region56: #{tpu_custom_call.1} parent=5 // pred_fallthru
        _
    $region6: #{tpu_custom_call.1} parent=1 // loop_footer
      %s21 = sadd.s32 1, %s17
    $region7: #{tpu_custom_call.1} parent=1 // loop_footer_branch
      %16 = sbr.rel target = $region3
    $region8: #{tpu_custom_call.1} parent=1 // loop_exit
      _
    %537 = vsyncpa [#allocation3], 1
    %s538 = scalar_lea.sflag [#allocation3], 1
    %539 = vsyncpa %s538, 1
    %540 = vsyncpa [#allocation6], 1
    %541 = vsyncpa [#allocation4], 1
    %s542 = scalar_lea.sflag [#allocation4], 1
    %543 = vsyncpa %s542, 1

</llo_original>
